<compile_context>
chip_gen: v7x
topology: tpu7x:2x2x1
jax: 0.10.0
libtpu: 0.0.40
codegen_flags: <defaults>
</compile_context>

<pallas_src>
import jax
import jax.numpy as jnp
from jax.experimental import pallas as pl
from jax.experimental.pallas import tpu as pltpu


def _dice_kernel(x_ref, t_ref, o_ref, num_acc, den_acc):
    """Grid iterates over row-tiles; num_acc / den_acc (VMEM, block-shaped)
    carry elementwise partial sums across grid steps.  The full cross-lane
    reduce and the closed-form loss are computed only on the last step."""
    i = pl.program_id(0)

    @pl.when(i == 0)
    def _():
        num_acc[...] = jnp.zeros_like(num_acc)
        den_acc[...] = jnp.zeros_like(den_acc)

    x = x_ref[...].astype(jnp.float32)
    t = t_ref[...].astype(jnp.float32)
    s = jax.nn.sigmoid(x)  # padded positions hold -1e4 -> sigmoid == 0.0

    num_acc[...] += t * s        # factor of 2 applied once at finalize
    den_acc[...] += t + s

    @pl.when(i == pl.num_programs(0) - 1)
    def _():
        num = 2.0 * jnp.sum(num_acc[...])
        den = jnp.sum(den_acc[...])
        o_ref[0, 0] = 1.0 - (num + 1.0) / (den + 1.0)


def dice_loss(x, target, *, block_rows=1024, lanes=128):
    x_flat = x.reshape(-1)
    t_flat = target.reshape(-1)
    n = x_flat.shape[0]

    # Cap the tile at the (sublane-rounded) data size so small inputs do not
    # pad up to a huge block; keep it a multiple of 8 sublanes.
    n_rows_raw = pl.cdiv(n, lanes)
    block_rows = min(block_rows, pl.cdiv(n_rows_raw, 8) * 8)
    n_rows = pl.cdiv(n_rows_raw, block_rows) * block_rows
    pad = n_rows * lanes - n

    if pad:
        # Pad logits with a large negative value (sigmoid -> exactly 0 in
        # bf16/f32) and target with 0, so no mask stream is needed.
        x_p = jnp.pad(x_flat, (0, pad), constant_values=-1e4)
        t_p = jnp.pad(t_flat, (0, pad))
    else:
        x_p, t_p = x_flat, t_flat
    x_p = x_p.reshape(n_rows, lanes)
    t_p = t_p.reshape(n_rows, lanes)

    grid = (n_rows // block_rows,)
    tile_spec = pl.BlockSpec((block_rows, lanes), lambda i: (i, 0))

    out = pl.pallas_call(
        _dice_kernel,
        out_shape=jax.ShapeDtypeStruct((1, 1), jnp.float32),
        grid_spec=pltpu.PrefetchScalarGridSpec(
            num_scalar_prefetch=0,
            grid=grid,
            in_specs=[tile_spec, tile_spec],
            out_specs=pl.BlockSpec(
                (1, 1), lambda i: (0, 0), memory_space=pltpu.SMEM
            ),
            scratch_shapes=[
                pltpu.VMEM((block_rows, lanes), jnp.float32),
                pltpu.VMEM((block_rows, lanes), jnp.float32),
            ],
        ),
        compiler_params=pltpu.CompilerParams(
            dimension_semantics=("arbitrary",),
        ),
    )(x_p, t_p)

    return out[0, 0]


def dice_loss_ref(x, target):
    s = jax.nn.sigmoid(x.astype(jnp.float32))
    t = target.astype(jnp.float32)
    num = jnp.sum(2.0 * t * s)
    den = jnp.sum(t + s)
    return 1.0 - (num + 1.0) / (den + 1.0)


if __name__ == "__main__":
    key = jax.random.PRNGKey(0)
    k_x, k_t = jax.random.split(key)

    # Small shapes consistent with a segmentation-style NCHW input.
    shape = (2, 4, 16, 16)
    x = jax.random.normal(k_x, shape, dtype=jnp.float32)
    target = jax.random.bernoulli(k_t, 0.5, shape).astype(jnp.float32)

    res = dice_loss(x, target)
    res = jax.block_until_ready(res)

    ref = dice_loss_ref(x, target)
    assert jnp.allclose(res, ref, rtol=1e-5, atol=1e-6), (res, ref)

    print("KERNEL_OK")
</pallas_src>

<mosaic_0001>
module attributes {stable_mosaic.version = 11 : i64} {
  func.func @_dice_kernel(%arg0: i32, %arg1: memref<16x128xf32, #tpu.memory_space<vmem>>, %arg2: memref<16x128xf32, #tpu.memory_space<vmem>>, %arg3: memref<1x1xf32, #tpu.memory_space<smem>>, %arg4: memref<16x128xf32, #tpu.memory_space<vmem>>, %arg5: memref<16x128xf32, #tpu.memory_space<vmem>>) attributes {dimension_semantics = [#tpu.dimension_semantics<arbitrary>], iteration_bounds = array<i64: 1>, scalar_prefetch = 0 : i64, scratch_operands = 2 : i64, tpu.core_type = #tpu.core_type<tc>, window_params = [{transform_indices = @transform_0, window_bounds = array<i64: 16, 128>}, {transform_indices = @transform_1, window_bounds = array<i64: 16, 128>}, {transform_indices = @transform_2, window_bounds = array<i64: 1, 1>}]} {
    %c0_i32 = arith.constant 0 : i32
    %0 = arith.cmpi eq, %arg0, %c0_i32 : i32
    %1 = arith.extui %0 : i1 to i32
    %c0_i32_0 = arith.constant 0 : i32
    %2 = arith.cmpi ne, %1, %c0_i32_0 : i32
    scf.if %2 {
      %cst_14 = arith.constant 0.000000e+00 : f32
      %21 = vector.broadcast %cst_14 : f32 to vector<16x128xf32>
      %c0_15 = arith.constant 0 : index
      %c0_16 = arith.constant 0 : index
      %22 = vector.load %arg4[%c0_15, %c0_16] : memref<16x128xf32, #tpu.memory_space<vmem>>, vector<16x128xf32>
      tpu.vector_store %arg4[%c0_15, %c0_16], %21 {strides = array<i32>} : memref<16x128xf32, #tpu.memory_space<vmem>>, vector<16x128xf32>,
      %cst_17 = arith.constant 0.000000e+00 : f32
      %23 = vector.broadcast %cst_17 : f32 to vector<16x128xf32>
      %c0_18 = arith.constant 0 : index
      %c0_19 = arith.constant 0 : index
      %24 = vector.load %arg5[%c0_18, %c0_19] : memref<16x128xf32, #tpu.memory_space<vmem>>, vector<16x128xf32>
      tpu.vector_store %arg5[%c0_18, %c0_19], %23 {strides = array<i32>} : memref<16x128xf32, #tpu.memory_space<vmem>>, vector<16x128xf32>,
    } else {
    }
    %c0 = arith.constant 0 : index
    %c0_1 = arith.constant 0 : index
    %3 = vector.load %arg1[%c0, %c0_1] : memref<16x128xf32, #tpu.memory_space<vmem>>, vector<16x128xf32>
    %c0_2 = arith.constant 0 : index
    %c0_3 = arith.constant 0 : index
    %4 = vector.load %arg2[%c0_2, %c0_3] : memref<16x128xf32, #tpu.memory_space<vmem>>, vector<16x128xf32>
    %5 = arith.negf %3 : vector<16x128xf32>
    %6 = math.exp %5 : vector<16x128xf32>
    %cst = arith.constant 1.000000e+00 : f32
    %7 = vector.broadcast %cst : f32 to vector<16x128xf32>
    %8 = arith.addf %7, %6 : vector<16x128xf32>
    %9 = arith.divf %7, %8 : vector<16x128xf32>
    %c0_4 = arith.constant 0 : index
    %c0_5 = arith.constant 0 : index
    %10 = vector.load %arg4[%c0_4, %c0_5] : memref<16x128xf32, #tpu.memory_space<vmem>>, vector<16x128xf32>
    %11 = arith.mulf %4, %9 : vector<16x128xf32>
    %12 = arith.addf %10, %11 : vector<16x128xf32>
    %c0_6 = arith.constant 0 : index
    %c0_7 = arith.constant 0 : index
    %13 = vector.load %arg4[%c0_6, %c0_7] : memref<16x128xf32, #tpu.memory_space<vmem>>, vector<16x128xf32>
    tpu.vector_store %arg4[%c0_6, %c0_7], %12 {strides = array<i32>} : memref<16x128xf32, #tpu.memory_space<vmem>>, vector<16x128xf32>,
    %c0_8 = arith.constant 0 : index
    %c0_9 = arith.constant 0 : index
    %14 = vector.load %arg5[%c0_8, %c0_9] : memref<16x128xf32, #tpu.memory_space<vmem>>, vector<16x128xf32>
    %15 = arith.addf %4, %9 : vector<16x128xf32>
    %16 = arith.addf %14, %15 : vector<16x128xf32>
    %c0_10 = arith.constant 0 : index
    %c0_11 = arith.constant 0 : index
    %17 = vector.load %arg5[%c0_10, %c0_11] : memref<16x128xf32, #tpu.memory_space<vmem>>, vector<16x128xf32>
    tpu.vector_store %arg5[%c0_10, %c0_11], %16 {strides = array<i32>} : memref<16x128xf32, #tpu.memory_space<vmem>>, vector<16x128xf32>,
    %c0_i32_12 = arith.constant 0 : i32
    %18 = arith.cmpi eq, %arg0, %c0_i32_12 : i32
    %19 = arith.extui %18 : i1 to i32
    %c0_i32_13 = arith.constant 0 : i32
    %20 = arith.cmpi ne, %19, %c0_i32_13 : i32
    scf.if %20 {
      %c0_14 = arith.constant 0 : index
      %c0_15 = arith.constant 0 : index
      %21 = vector.load %arg4[%c0_14, %c0_15] : memref<16x128xf32, #tpu.memory_space<vmem>>, vector<16x128xf32>
      %22 = vector.shape_cast %21 : vector<16x128xf32> to vector<1x16x128xf32>
      %cst_16 = arith.constant dense<0.000000e+00> : vector<1xf32>
      %23 = vector.multi_reduction <add>, %22, %cst_16 [1, 2] : vector<1x16x128xf32> to vector<1xf32>
      %24 = vector.shape_cast %23 : vector<1xf32> to vector<1x1x1xf32>
      %25 = vector.extract %24[0, 0, 0] : f32 from vector<1x1x1xf32>
      %cst_17 = arith.constant 2.000000e+00 : f32
      %26 = arith.mulf %cst_17, %25 : f32
      %c0_18 = arith.constant 0 : index
      %c0_19 = arith.constant 0 : index
      %27 = vector.load %arg5[%c0_18, %c0_19] : memref<16x128xf32, #tpu.memory_space<vmem>>, vector<16x128xf32>
      %28 = vector.shape_cast %27 : vector<16x128xf32> to vector<1x16x128xf32>
      %cst_20 = arith.constant dense<0.000000e+00> : vector<1xf32>
      %29 = vector.multi_reduction <add>, %28, %cst_20 [1, 2] : vector<1x16x128xf32> to vector<1xf32>
      %30 = vector.shape_cast %29 : vector<1xf32> to vector<1x1x1xf32>
      %31 = vector.extract %30[0, 0, 0] : f32 from vector<1x1x1xf32>
      %cst_21 = arith.constant 1.000000e+00 : f32
      %32 = arith.addf %26, %cst_21 : f32
      %cst_22 = arith.constant 1.000000e+00 : f32
      %33 = arith.addf %31, %cst_22 : f32
      %34 = arith.divf %32, %33 : f32
      %cst_23 = arith.constant 1.000000e+00 : f32
      %35 = arith.subf %cst_23, %34 : f32
      %c0_24 = arith.constant 0 : index
      %c0_25 = arith.constant 0 : index
      %36 = memref.load %arg3[%c0_24, %c0_25] : memref<1x1xf32, #tpu.memory_space<smem>>
      memref.store %35, %arg3[%c0_24, %c0_25] : memref<1x1xf32, #tpu.memory_space<smem>>
    } else {
    }
    return
  }
  func.func @transform_0(%arg0: i32) -> (i32, i32) {
    %c0_i32 = arith.constant 0 : i32
    %c0_i32_0 = arith.constant 0 : i32
    return %arg0, %c0_i32 : i32, i32
  }
  func.func @transform_1(%arg0: i32) -> (i32, i32) {
    %c0_i32 = arith.constant 0 : i32
    %c0_i32_0 = arith.constant 0 : i32
    return %arg0, %c0_i32 : i32, i32
  }
  func.func @transform_2(%arg0: i32) -> (i32, i32) {
    %c0_i32 = arith.constant 0 : i32
    %c0_i32_0 = arith.constant 0 : i32
    %c0_i32_1 = arith.constant 0 : i32
    return %c0_i32, %c0_i32_0 : i32, i32
  }
}

</mosaic_0001>

<llo_original>
// kernel: tpu_custom_call.1
$region0: #{tpu_custom_call.1}
  #allocation0 [shape = 'u32[]', space=smem, size = 0x4, offset = 0x4, fixed_abs, tag = 'smem constant byte address 0x4 - core index']
  #allocation1 [shape = 'u32[144,128]{1,0:T(1,128)}', space=vmem, size = 0x12000, scoped, tag = 'internal scratch']
  #allocation2 [shape = 'f32[16,128]{1,0:T(8,128)}', space=vmem, size = 0x2000, scoped, tag = 'scratch operand']
  #allocation3 [shape = 'f32[16,128]{1,0:T(8,128)}', space=vmem, size = 0x2000, scoped, tag = 'scratch operand']
  %s0 = inlined_call_operand.hbm [shape: f32[16,128], index: 0, kind: input, shape index: {}]
  %s1 = inlined_call_operand.hbm [shape: f32[16,128], index: 1, kind: input, shape index: {}]
  %s2 = inlined_call_operand.hbm [shape: f32[1,1], index: 2, kind: output, shape index: {}]
  %s3 = sld [smem:[#allocation0]]
  $region34: #{tpu_custom_call.1} parent=0
    _
  %s5 = ssub.s32 1, %s3
  %s6 = scalar_select 0, %s5, %s3
  $region1: #{tpu_custom_call.1} parent=0
    #allocation4 [shape = 'u8[8192]{0}', space=vmem, size = 0x2000, scoped, tag = 'input window, operand 0, single buffered']
    #allocation5 [shape = 's32[1]{0}', space=sflag, size = 0x4, scoped, tag = 'scoped memory for tpu_custom_call.1']
    #allocation6 [shape = 's32[1]{0}', space=sflag, size = 0x4, scoped, tag = 'scoped memory for tpu_custom_call.1']
    #allocation7 [shape = 'u8[8192]{0}', space=vmem, size = 0x2000, scoped, tag = 'input window, operand 1, single buffered']
    #allocation8 [shape = 's32[1]{0}', space=sflag, size = 0x4, scoped, tag = 'scoped memory for tpu_custom_call.1']
    #allocation9 [shape = 'u8[512]{0}', space=smem, size = 0x200, scoped, tag = 'output window, operand 0, single buffered']
    %7 = vsyncpa [#allocation5], 0
    %8 = vsyncpa [#allocation8], 0
    %9 = vsyncpa [#allocation6], 0
    // Predicated region
    $region2: #{tpu_custom_call.1} parent=1 // pred_check
      _
    $region3: #{tpu_custom_call.1} parent=1 // pred_check_branch
      %11 = sbr.rel (0) target = $region5
    $region4: #{tpu_custom_call.1} parent=1 // pred_region
      %s13 = ssub.s32 256, 256
      %14 = vsyncadd [#allocation5], %s13
      %s15 = sshll.u32 [#allocation4], 4
      %s16 = int_to_ptr.vmem [resolvable:$true] %s15
      %21 = dma.hbm_to_vmem [thread:$0]  %s0, 256, %s16, [#allocation5], 128, 128, 8
    $region5: #{tpu_custom_call.1} parent=1 // pred_fallthru
      _
    // Predicated region
    $region6: #{tpu_custom_call.1} parent=1 // pred_check
      _
    $region7: #{tpu_custom_call.1} parent=1 // pred_check_branch
      %23 = sbr.rel (0) target = $region9
    $region8: #{tpu_custom_call.1} parent=1 // pred_region
      %s25 = ssub.s32 256, 256
      %26 = vsyncadd [#allocation8], %s25
      %s27 = sshll.u32 [#allocation7], 4
      %s28 = int_to_ptr.vmem [resolvable:$true] %s27
      %33 = dma.hbm_to_vmem [thread:$0]  %s1, 256, %s28, [#allocation8], 128, 128, 8
    $region9: #{tpu_custom_call.1} parent=1 // pred_fallthru
      _
    // Predicated region
    $region10: #{tpu_custom_call.1} parent=1 // pred_check
      _
    $region11: #{tpu_custom_call.1} parent=1 // pred_check_branch
      %35 = sbr.rel (0) target = $region13
    $region12: #{tpu_custom_call.1} parent=1 // pred_region
      %36 = dma.done [#allocation5], 256
    $region13: #{tpu_custom_call.1} parent=1 // pred_fallthru
      _
    // Predicated region
    $region14: #{tpu_custom_call.1} parent=1 // pred_check
      _
    $region15: #{tpu_custom_call.1} parent=1 // pred_check_branch
      %38 = sbr.rel (0) target = $region17
    $region16: #{tpu_custom_call.1} parent=1 // pred_region
      %39 = dma.done [#allocation8], 256
    $region17: #{tpu_custom_call.1} parent=1 // pred_fallthru
      _
    %p40 = scmp.eq.s32.totalorder 0, 0
    // Predicated region
    $region18: #{tpu_custom_call.1} parent=1 // pred_check
      %p41 = pneg %p40
    $region19: #{tpu_custom_call.1} parent=1 // pred_check_branch
      %43 = sbr.rel (%p41) target = $region21
    $region20: #{tpu_custom_call.1} parent=1 // pred_region
      %44 = vst [vmem:[#allocation2] sm:$0xff] 0.0
      %45 = vst [vmem:[#allocation2 + $0x8] sm:$0xff] 0.0
      %46 = vst [vmem:[#allocation3] sm:$0xff] 0.0
      %47 = vst [vmem:[#allocation3 + $0x8] sm:$0xff] 0.0
    $region21: #{tpu_custom_call.1} parent=1 // pred_fallthru
      _
    %v48 = vld [vmem:[#allocation4] sm:$0xff]
    %v49 = vld [vmem:[#allocation4 + $0x8] sm:$0xff]
    %v50 = vld [vmem:[#allocation7] sm:$0xff]
    %v51 = vld [vmem:[#allocation7 + $0x8] sm:$0xff]
    %v52 = vxor.u32 %v48, 2147483648
    %v53 = vxor.u32 %v49, 2147483648
    %v54 = vmul.f32 %v52, 1.442695
    %v55 = vpow.pop %v54
    %v56 = vmul.f32 %v53, 1.442695
    %v57 = vpow.pop %v56
    %v58 = vadd.f32 %v55, 1.0
    %v59 = vadd.f32 %v57, 1.0
    %v60 = vrcp.pop %v58
    %v61 = vmul.f32 1.0, %v60
    %v62 = vrcp.pop %v59
    %v63 = vmul.f32 1.0, %v62
    %v64 = vld [vmem:[#allocation2] sm:$0xff]
    %v65 = vld [vmem:[#allocation2 + $0x8] sm:$0xff]
    %v66 = vmul.f32 %v50, %v61
    %v67 = vmul.f32 %v51, %v63
    %v68 = vadd.f32 %v64, %v66
    %v69 = vadd.f32 %v65, %v67
    %70 = vst [vmem:[#allocation2] sm:$0xff] %v68
    %71 = vst [vmem:[#allocation2 + $0x8] sm:$0xff] %v69
    %v72 = vld [vmem:[#allocation3] sm:$0xff]
    %v73 = vld [vmem:[#allocation3 + $0x8] sm:$0xff]
    %v74 = vadd.f32 %v50, %v61
    %v75 = vadd.f32 %v51, %v63
    %v76 = vadd.f32 %v72, %v74
    %v77 = vadd.f32 %v73, %v75
    %78 = vst [vmem:[#allocation3] sm:$0xff] %v76
    %79 = vst [vmem:[#allocation3 + $0x8] sm:$0xff] %v77
    // Predicated region
    $region22: #{tpu_custom_call.1} parent=1 // pred_check
      %p80 = pneg %p40
    $region23: #{tpu_custom_call.1} parent=1 // pred_check_branch
      %82 = sbr.rel (%p80) target = $region25
    $region24: #{tpu_custom_call.1} parent=1 // pred_region
      %v83 = vld [vmem:[#allocation2] sm:$0xff]
      %v84 = vld [vmem:[#allocation2 + $0x8] sm:$0xff]
      %v85 = vadd.f32 %v83, %v84
      %86 = vadd.xlane.f32.xlu0 %v85
      %v87 = vpop.xlane.xlu0 %86
      %v88 = vrot.slane %v87, 4
      %v89 = vadd.f32 %v87, %v88
      %v90 = vrot.slane %v89, 2
      %v91 = vadd.f32 %v89, %v90
      %v92 = vrot.slane %v91, 1
      %v93 = vadd.f32 %v91, %v92
      %s94 = vtos %v93
      %s95 = smul.f32 %s94, 2.0
      %v96 = vld [vmem:[#allocation3] sm:$0xff]
      %v97 = vld [vmem:[#allocation3 + $0x8] sm:$0xff]
      %v98 = vadd.f32 %v96, %v97
      %99 = vadd.xlane.f32.xlu0 %v98
      %v100 = vpop.xlane.xlu0 %99
      %v101 = vrot.slane %v100, 4
      %v102 = vadd.f32 %v100, %v101
      %v103 = vrot.slane %v102, 2
      %v104 = vadd.f32 %v102, %v103
      %v105 = vrot.slane %v104, 1
      %v106 = vadd.f32 %v104, %v105
      %s107 = vtos %v106
      %s108 = sadd.f32 %s95, 1.0
      %s109 = sadd.f32 %s107, 1.0
      %v110 = vstv %s109
      %v111 = vrcp.pop %v110
      %s112 = vtos %v111
      %s113 = smul.f32 %s108, %s112
      %s114 = ssub.f32 1.0, %s113
      %s115 = scalar_lea.smem [#allocation9], 0
      %116 = sst [smem:[%s115]] %s114
    $region25: #{tpu_custom_call.1} parent=1 // pred_fallthru
      _
    // Predicated region
    $region26: #{tpu_custom_call.1} parent=1 // pred_check
      _
    $region27: #{tpu_custom_call.1} parent=1 // pred_check_branch
      %118 = sbr.rel (0) target = $region29
    $region28: #{tpu_custom_call.1} parent=1 // pred_region
      %s120 = ssub.s32 16, 16
      %121 = vsyncadd [#allocation6], %s120
      %124 = dma.smem_to_hbm [#allocation9], 16, %s2, [#allocation6]
    $region29: #{tpu_custom_call.1} parent=1 // pred_fallthru
      _
    // Predicated region
    $region30: #{tpu_custom_call.1} parent=1 // pred_check
      _
    $region31: #{tpu_custom_call.1} parent=1 // pred_check_branch
      %126 = sbr.rel (0) target = $region33
    $region32: #{tpu_custom_call.1} parent=1 // pred_region
      %127 = dma.done [#allocation6], 16
    $region33: #{tpu_custom_call.1} parent=1 // pred_fallthru
      _
    %128 = sfence
    %129 = vsyncpa [#allocation5], 1
    %130 = vsyncpa [#allocation8], 1
    %131 = vsyncpa [#allocation6], 1

</llo_original>
